<compile_context>
chip_gen: v7x
topology: tpu7x:2x2x1
jax: 0.10.0
libtpu: 0.0.40
codegen_flags: <defaults>
</compile_context>

<pallas_src>
import functools
import math

import jax
import jax.numpy as jnp
from jax import lax
from jax.experimental import pallas as pl
from jax.experimental.pallas import tpu as pltpu

_NEG_BIG = -1e30  # large negative instead of -inf (cheaper, avoids inf-inf NaN risk)


def _attn_kernel(qi_map_ref, ki_map_ref,          # scalar-prefetch (SMEM)
                 xq_ref, xkv_ref, w_ref,           # inputs (VMEM tiles)
                 o_ref,                            # output (VMEM tile)
                 q_sc, m_sc, l_sc, acc_sc,         # scratch
                 *, t, c):
    # qi_map_ref/ki_map_ref: (n_pairs,) i32  flattened lower-triangular schedule
    # xq_ref:  (1, t, C) f32   query-side rows of x
    # xkv_ref: (1, t, C) f32   key/value-side rows of x
    # w_ref:   (2C+1, C) bf16  full c_attn weight (rows: Wq | Wk | Wv)
    # o_ref:   (1, 1, t) f32   lane-dense output row for this query tile
    p = pl.program_id(1)
    qi = qi_map_ref[p]          # query-tile index
    ki = ki_map_ref[p]          # key/value-tile index (ki <= qi by construction)

    contract_last = (((1,), (1,)), ((), ()))   # contract last dim of both operands

    # ---- once per query tile (first kv step): project q, reset online-softmax state.
    @pl.when(ki == 0)
    def _init():
        xq = xq_ref[0].astype(jnp.bfloat16)                        # (t, C)
        wq = w_ref[0:c, :]                                         # (C, C) rows of W
        q = lax.dot_general(xq, wq, contract_last,
                            preferred_element_type=jnp.float32)    # x @ Wq^T, f32 acc
        q_sc[...] = (q * (1.0 / math.sqrt(c))).astype(jnp.bfloat16)
        m_sc[...] = jnp.full(m_sc.shape, _NEG_BIG, jnp.float32)
        l_sc[...] = jnp.zeros(l_sc.shape, jnp.float32)
        acc_sc[...] = jnp.zeros(acc_sc.shape, jnp.float32)

    # ---- online-softmax update.  Every visited (qi, ki) pair is live work: the
    # flattened schedule never produces a fully-masked tile, so no guard needed.
    xk = xkv_ref[0].astype(jnp.bfloat16)                           # (t, C)
    wk = w_ref[c:2 * c, :]                                         # (C, C)
    wv = w_ref[2 * c:2 * c + 1, :]                                 # (1, C)

    k = lax.dot_general(xk, wk, contract_last,
                        preferred_element_type=jnp.float32).astype(jnp.bfloat16)
    # v projection as a lane-dense row: (1, C) . (t, C)^T -> (1, t), f32 accumulate
    v_row = lax.dot_general(wv, xk, contract_last,
                            preferred_element_type=jnp.float32)

    # scores (q already carries the 1/sqrt(C) scale); no explicit k transpose.
    s = lax.dot_general(q_sc[...], k, contract_last,
                        preferred_element_type=jnp.float32)        # (t, t) f32

    # causal mask from tile-local iotas offset by the tile origins (only the
    # diagonal tile needs it, but the VPU select is cheap).
    row = lax.broadcasted_iota(jnp.int32, (t, t), 0) + qi * t
    col = lax.broadcasted_iota(jnp.int32, (t, t), 1) + ki * t
    s = jnp.where(col <= row, s, _NEG_BIG)

    m_prev = m_sc[...]                                             # (t, 1)
    m_new = jnp.maximum(m_prev, jnp.max(s, axis=-1, keepdims=True))
    alpha = jnp.exp(m_prev - m_new)
    e = jnp.exp(s - m_new)                                         # (t, t) f32
    l_sc[...] = alpha * l_sc[...] + jnp.sum(e, axis=-1, keepdims=True)
    # y numerator on the VPU/XLU: no (t,t)@(t,1) MXU matmul, no normalized p matrix.
    acc_sc[...] = alpha * acc_sc[...] + jnp.sum(e * v_row, axis=-1, keepdims=True)
    m_sc[...] = m_new

    # ---- last kv step of this query tile: normalize and store one lane-dense row.
    @pl.when(ki == qi)
    def _finalize():
        y = acc_sc[...] * pl.reciprocal(l_sc[...], approx=True)    # (t, 1)
        o_ref[0] = jnp.transpose(y).astype(o_ref.dtype)            # (1, t) lane-dense

    # TODO(synk): self_attend=False branch (att[:, :, -1, -1] = -inf) not exposed;
    #             default self_attend=True is implemented.
    # TODO(synk): self.record = att[:, :, -1] (Python side-effect) is not returned.


def causal_self_attention(x, w_attn, *, block_t=None):
    """x: (B, T, C) f32, w_attn: (2*C+1, C) f32 (PyTorch nn.Linear weight, bias=False).

    Returns y: (B, T, 1) f32 — CausalSelfAttention.forward with n_head=1,
    self_attend=True.
    """
    B, T, C = x.shape
    assert w_attn.shape == (2 * C + 1, C)

    if block_t is None:
        # Biggest lane-legal tile that keeps per-step overhead amortized:
        # output lane dim must be a multiple of 128 or the full T.
        if T <= 128:
            block_t = T
        elif T % 256 == 0:
            block_t = 256
        else:
            block_t = 128
    assert T % block_t == 0, "T must be divisible by the query/kv tile size"
    nt = T // block_t

    # Flattened lower-triangular (qi, ki) schedule: tiles strictly above the
    # causal diagonal are never visited (no DMA, no grid-step overhead).
    qi_list, ki_list = [], []
    for qi in range(nt):
        for ki in range(qi + 1):
            qi_list.append(qi)
            ki_list.append(ki)
    qi_map = jnp.asarray(qi_list, dtype=jnp.int32)
    ki_map = jnp.asarray(ki_list, dtype=jnp.int32)
    n_pairs = len(qi_list)

    # Single dtype cast, no transpose / slicing of the weight in HBM; the kernel
    # slices W by rows and contracts on the last dim (x @ W^T) directly.
    w_bf16 = w_attn.astype(jnp.bfloat16)

    kernel = functools.partial(_attn_kernel, t=block_t, c=C)

    out = pl.pallas_call(
        kernel,
        out_shape=jax.ShapeDtypeStruct((B, 1, T), jnp.float32),
        grid_spec=pltpu.PrefetchScalarGridSpec(
            num_scalar_prefetch=2,
            grid=(B, n_pairs),
            in_specs=[
                # x: query rows (block index stays constant across the ki steps
                # of a qi tile, so it is not re-DMA'd).
                pl.BlockSpec((1, block_t, C), lambda b, p, qm, km: (b, qm[p], 0)),
                # x: key/value rows
                pl.BlockSpec((1, block_t, C), lambda b, p, qm, km: (b, km[p], 0)),
                # fused qkv weight (resident)
                pl.BlockSpec((2 * C + 1, C), lambda b, p, qm, km: (0, 0)),
            ],
            out_specs=pl.BlockSpec((1, 1, block_t),
                                   lambda b, p, qm, km: (b, 0, qm[p])),
            scratch_shapes=[
                pltpu.VMEM((block_t, C), jnp.bfloat16),   # scaled q tile (persists over kv)
                pltpu.VMEM((block_t, 1), jnp.float32),    # running max m
                pltpu.VMEM((block_t, 1), jnp.float32),    # running denominator l
                pltpu.VMEM((block_t, 1), jnp.float32),    # running numerator acc
            ],
        ),
        compiler_params=pltpu.CompilerParams(
            dimension_semantics=("parallel", "arbitrary"),
        ),
    )(qi_map, ki_map, x, x, w_bf16)

    # lane-dense (B, 1, T) kernel output -> (B, T, 1) to match the module.
    return jnp.swapaxes(out, 1, 2)


def _reference(x, w_attn):
    """Pure-JAX reference mirroring the PyTorch forward (n_head=1)."""
    B, T, C = x.shape
    qkv = jnp.einsum("btc,oc->bto", x, w_attn)           # (B, T, 2C+1)
    q, k, v = qkv[..., :C], qkv[..., C:2 * C], qkv[..., 2 * C:]
    att = jnp.einsum("btc,bsc->bts", q, k) * (1.0 / math.sqrt(C))
    mask = jnp.tril(jnp.ones((T, T), dtype=bool))
    att = jnp.where(mask[None], att, -jnp.inf)
    att = jax.nn.softmax(att, axis=-1)
    return jnp.einsum("bts,bso->bto", att, v)            # (B, T, 1)


def _make_inputs(key, B, T, C):
    kx, kw = jax.random.split(key)
    x = jax.random.normal(kx, (B, T, C), dtype=jnp.float32)
    bound = 1.0 / math.sqrt(C)                           # nn.Linear default init range
    w = jax.random.uniform(kw, (2 * C + 1, C), dtype=jnp.float32,
                           minval=-bound, maxval=bound)
    return x, w


if __name__ == "__main__":
    key = jax.random.PRNGKey(0)
    k1, k2 = jax.random.split(key)

    # Small shape implied by the module (n_head must be 1; block_size >= T).
    B, T, C = 2, 8, 32
    x, w_attn = _make_inputs(k1, B, T, C)
    y = jax.block_until_ready(causal_self_attention(x, w_attn))
    y_ref = _reference(x, w_attn)
    assert y.shape == (B, T, 1)
    assert jnp.allclose(y, y_ref, atol=5e-2, rtol=5e-2)  # bf16 MXU operands, f32 accum

    # Tiled flash path with the default (large) tile: T=512 -> block_t=256, 2x2 tiles.
    B2, T2, C2 = 2, 512, 32
    x2, w2 = _make_inputs(k2, B2, T2, C2)
    y2 = jax.block_until_ready(causal_self_attention(x2, w2))
    y2_ref = _reference(x2, w2)
    assert y2.shape == (B2, T2, 1)
    assert jnp.allclose(y2, y2_ref, atol=7.5e-2, rtol=7.5e-2)

    # Same data, smaller tile: exercises the flattened lower-triangular schedule
    # with many (qi, ki) pairs (nt=4 -> 10 pairs per batch).
    y3 = jax.block_until_ready(causal_self_attention(x2, w2, block_t=128))
    assert jnp.allclose(y3, y2_ref, atol=7.5e-2, rtol=7.5e-2)

    print("KERNEL_OK")
</pallas_src>

<mosaic_0001>
module attributes {stable_mosaic.version = 11 : i64} {
  func.func @_attn_kernel(%arg0: i32, %arg1: i32, %arg2: memref<1xi32, #tpu.memory_space<smem>>, %arg3: memref<1xi32, #tpu.memory_space<smem>>, %arg4: memref<1x8x32xf32, #tpu.memory_space<vmem>>, %arg5: memref<1x8x32xf32, #tpu.memory_space<vmem>>, %arg6: memref<65x32xbf16, #tpu.memory_space<vmem>>, %arg7: memref<1x1x8xf32, #tpu.memory_space<vmem>>, %arg8: memref<8x32xbf16, #tpu.memory_space<vmem>>, %arg9: memref<8x1xf32, #tpu.memory_space<vmem>>, %arg10: memref<8x1xf32, #tpu.memory_space<vmem>>, %arg11: memref<8x1xf32, #tpu.memory_space<vmem>>) attributes {dimension_semantics = [#tpu.dimension_semantics<parallel>, #tpu.dimension_semantics<arbitrary>], iteration_bounds = array<i64: 2, 1>, scalar_prefetch = 2 : i64, scratch_operands = 4 : i64, tpu.core_type = #tpu.core_type<tc>, window_params = [{transform_indices = @transform_0, window_bounds = array<i64: 1, 8, 32>}, {transform_indices = @transform_1, window_bounds = array<i64: 1, 8, 32>}, {pipeline_mode = #tpu.pipeline_mode<synchronous>, transform_indices = @transform_2, window_bounds = array<i64: 65, 32>}, {transform_indices = @transform_3, window_bounds = array<i64: 1, 1, 8>}]} {
    %0 = arith.index_cast %arg1 : i32 to index
    %1 = memref.load %arg2[%0] : memref<1xi32, #tpu.memory_space<smem>>
    %2 = arith.index_cast %arg1 : i32 to index
    %3 = memref.load %arg3[%2] : memref<1xi32, #tpu.memory_space<smem>>
    %c0_i32 = arith.constant 0 : i32
    %4 = arith.cmpi eq, %3, %c0_i32 : i32
    %5 = arith.extui %4 : i1 to i32
    %c0_i32_0 = arith.constant 0 : i32
    %6 = arith.cmpi ne, %5, %c0_i32_0 : i32
    scf.if %6 {
      %c0_27 = arith.constant 0 : index
      %c0_28 = arith.constant 0 : index
      %c0_29 = arith.constant 0 : index
      %55 = vector.load %arg4[%c0_27, %c0_28, %c0_29] : memref<1x8x32xf32, #tpu.memory_space<vmem>>, vector<1x8x32xf32>
      %56 = vector.shape_cast %55 : vector<1x8x32xf32> to vector<8x32xf32>
      %57 = arith.truncf %56 : vector<8x32xf32> to vector<8x32xbf16>
      %c0_30 = arith.constant 0 : index
      %c0_31 = arith.constant 0 : index
      %58 = vector.load %arg6[%c0_30, %c0_31] : memref<65x32xbf16, #tpu.memory_space<vmem>>, vector<32x32xbf16>
      %cst_32 = arith.constant dense<0.000000e+00> : vector<8x32xf32>
      %59 = tpu.matmul %57, %58, %cst_32 {dimension_numbers = #tpu.dot_dimension_numbers<[1], [1], [0], [0], [0, 0, 1, 0], [], []>} : vector<8x32xbf16>, vector<32x32xbf16>, vector<8x32xf32> -> vector<8x32xf32>
      %cst_33 = arith.constant 0.176776692 : f32
      %60 = vector.broadcast %cst_33 : f32 to vector<8x32xf32>
      %61 = arith.mulf %59, %60 : vector<8x32xf32>
      %62 = arith.truncf %61 : vector<8x32xf32> to vector<8x32xbf16>
      %c0_34 = arith.constant 0 : index
      %c0_35 = arith.constant 0 : index
      %63 = vector.load %arg8[%c0_34, %c0_35] : memref<8x32xbf16, #tpu.memory_space<vmem>>, vector<8x32xbf16>
      tpu.vector_store %arg8[%c0_34, %c0_35], %62 {strides = array<i32>} : memref<8x32xbf16, #tpu.memory_space<vmem>>, vector<8x32xbf16>,
      %cst_36 = arith.constant -1.000000e+30 : f32
      %64 = vector.broadcast %cst_36 : f32 to vector<8x1xf32>
      %c0_37 = arith.constant 0 : index
      %c0_38 = arith.constant 0 : index
      %65 = vector.load %arg9[%c0_37, %c0_38] : memref<8x1xf32, #tpu.memory_space<vmem>>, vector<8x1xf32>
      tpu.vector_store %arg9[%c0_37, %c0_38], %64 {strides = array<i32>} : memref<8x1xf32, #tpu.memory_space<vmem>>, vector<8x1xf32>,
      %cst_39 = arith.constant 0.000000e+00 : f32
      %66 = vector.broadcast %cst_39 : f32 to vector<8x1xf32>
      %c0_40 = arith.constant 0 : index
      %c0_41 = arith.constant 0 : index
      %67 = vector.load %arg10[%c0_40, %c0_41] : memref<8x1xf32, #tpu.memory_space<vmem>>, vector<8x1xf32>
      tpu.vector_store %arg10[%c0_40, %c0_41], %66 {strides = array<i32>} : memref<8x1xf32, #tpu.memory_space<vmem>>, vector<8x1xf32>,
      %cst_42 = arith.constant 0.000000e+00 : f32
      %68 = vector.broadcast %cst_42 : f32 to vector<8x1xf32>
      %c0_43 = arith.constant 0 : index
      %c0_44 = arith.constant 0 : index
      %69 = vector.load %arg11[%c0_43, %c0_44] : memref<8x1xf32, #tpu.memory_space<vmem>>, vector<8x1xf32>
      tpu.vector_store %arg11[%c0_43, %c0_44], %68 {strides = array<i32>} : memref<8x1xf32, #tpu.memory_space<vmem>>, vector<8x1xf32>,
    } else {
    }
    %c0 = arith.constant 0 : index
    %c0_1 = arith.constant 0 : index
    %c0_2 = arith.constant 0 : index
    %7 = vector.load %arg5[%c0, %c0_1, %c0_2] : memref<1x8x32xf32, #tpu.memory_space<vmem>>, vector<1x8x32xf32>
    %8 = vector.shape_cast %7 : vector<1x8x32xf32> to vector<8x32xf32>
    %9 = arith.truncf %8 : vector<8x32xf32> to vector<8x32xbf16>
    %c32 = arith.constant 32 : index
    %c0_3 = arith.constant 0 : index
    %10 = vector.load %arg6[%c32, %c0_3] : memref<65x32xbf16, #tpu.memory_space<vmem>>, vector<32x32xbf16>
    %c64 = arith.constant 64 : index
    %c0_4 = arith.constant 0 : index
    %11 = vector.load %arg6[%c64, %c0_4] : memref<65x32xbf16, #tpu.memory_space<vmem>>, vector<1x32xbf16>
    %cst = arith.constant dense<0.000000e+00> : vector<8x32xf32>
    %12 = tpu.matmul %9, %10, %cst {dimension_numbers = #tpu.dot_dimension_numbers<[1], [1], [0], [0], [0, 0, 1, 0], [], []>} : vector<8x32xbf16>, vector<32x32xbf16>, vector<8x32xf32> -> vector<8x32xf32>
    %13 = arith.truncf %12 : vector<8x32xf32> to vector<8x32xbf16>
    %cst_5 = arith.constant dense<0.000000e+00> : vector<1x8xf32>
    %14 = tpu.matmul %11, %9, %cst_5 {dimension_numbers = #tpu.dot_dimension_numbers<[1], [1], [0], [0], [0, 0, 1, 0], [], []>} : vector<1x32xbf16>, vector<8x32xbf16>, vector<1x8xf32> -> vector<1x8xf32>
    %c0_6 = arith.constant 0 : index
    %c0_7 = arith.constant 0 : index
    %15 = vector.load %arg8[%c0_6, %c0_7] : memref<8x32xbf16, #tpu.memory_space<vmem>>, vector<8x32xbf16>
    %cst_8 = arith.constant dense<0.000000e+00> : vector<8x8xf32>
    %16 = tpu.matmul %15, %13, %cst_8 {dimension_numbers = #tpu.dot_dimension_numbers<[1], [1], [0], [0], [0, 0, 1, 0], [], []>} : vector<8x32xbf16>, vector<8x32xbf16>, vector<8x8xf32> -> vector<8x8xf32>
    %17 = tpu.iota {dimensions = array<i32: 0>} : vector<8x8xi32>
    %c8_i32 = arith.constant 8 : i32
    %18 = arith.muli %1, %c8_i32 : i32
    %19 = vector.broadcast %18 : i32 to vector<8x8xi32>
    %20 = arith.addi %17, %19 : vector<8x8xi32>
    %21 = tpu.iota {dimensions = array<i32: 1>} : vector<8x8xi32>
    %c8_i32_9 = arith.constant 8 : i32
    %22 = arith.muli %3, %c8_i32_9 : i32
    %23 = vector.broadcast %22 : i32 to vector<8x8xi32>
    %24 = arith.addi %21, %23 : vector<8x8xi32>
    %25 = arith.cmpi sle, %24, %20 : vector<8x8xi32>
    %cst_10 = arith.constant -1.000000e+30 : f32
    %26 = vector.broadcast %cst_10 : f32 to vector<8x8xf32>
    %27 = arith.select %25, %16, %26 : vector<8x8xi1>, vector<8x8xf32>
    %c0_11 = arith.constant 0 : index
    %c0_12 = arith.constant 0 : index
    %28 = vector.load %arg9[%c0_11, %c0_12] : memref<8x1xf32, #tpu.memory_space<vmem>>, vector<8x1xf32>
    %cst_13 = arith.constant dense<0xFF800000> : vector<8xf32>
    %29 = vector.multi_reduction <maximumf>, %27, %cst_13 [1] : vector<8x8xf32> to vector<8xf32>
    %30 = vector.shape_cast %29 : vector<8xf32> to vector<8x1xf32>
    %31 = arith.maximumf %28, %30 : vector<8x1xf32>
    %32 = arith.subf %28, %31 : vector<8x1xf32>
    %33 = math.exp %32 : vector<8x1xf32>
    %34 = vector.broadcast %31 : vector<8x1xf32> to vector<8x8xf32>
    %35 = arith.subf %27, %34 : vector<8x8xf32>
    %36 = math.exp %35 : vector<8x8xf32>
    %c0_14 = arith.constant 0 : index
    %c0_15 = arith.constant 0 : index
    %37 = vector.load %arg10[%c0_14, %c0_15] : memref<8x1xf32, #tpu.memory_space<vmem>>, vector<8x1xf32>
    %38 = arith.mulf %33, %37 : vector<8x1xf32>
    %cst_16 = arith.constant dense<0.000000e+00> : vector<8xf32>
    %39 = vector.multi_reduction <add>, %36, %cst_16 [1] : vector<8x8xf32> to vector<8xf32>
    %40 = vector.shape_cast %39 : vector<8xf32> to vector<8x1xf32>
    %41 = arith.addf %38, %40 : vector<8x1xf32>
    %c0_17 = arith.constant 0 : index
    %c0_18 = arith.constant 0 : index
    %42 = vector.load %arg10[%c0_17, %c0_18] : memref<8x1xf32, #tpu.memory_space<vmem>>, vector<8x1xf32>
    tpu.vector_store %arg10[%c0_17, %c0_18], %41 {strides = array<i32>} : memref<8x1xf32, #tpu.memory_space<vmem>>, vector<8x1xf32>,
    %c0_19 = arith.constant 0 : index
    %c0_20 = arith.constant 0 : index
    %43 = vector.load %arg11[%c0_19, %c0_20] : memref<8x1xf32, #tpu.memory_space<vmem>>, vector<8x1xf32>
    %44 = arith.mulf %33, %43 : vector<8x1xf32>
    %45 = vector.broadcast %14 : vector<1x8xf32> to vector<8x8xf32>
    %46 = arith.mulf %36, %45 : vector<8x8xf32>
    %cst_21 = arith.constant dense<0.000000e+00> : vector<8xf32>
    %47 = vector.multi_reduction <add>, %46, %cst_21 [1] : vector<8x8xf32> to vector<8xf32>
    %48 = vector.shape_cast %47 : vector<8xf32> to vector<8x1xf32>
    %49 = arith.addf %44, %48 : vector<8x1xf32>
    %c0_22 = arith.constant 0 : index
    %c0_23 = arith.constant 0 : index
    %50 = vector.load %arg11[%c0_22, %c0_23] : memref<8x1xf32, #tpu.memory_space<vmem>>, vector<8x1xf32>
    tpu.vector_store %arg11[%c0_22, %c0_23], %49 {strides = array<i32>} : memref<8x1xf32, #tpu.memory_space<vmem>>, vector<8x1xf32>,
    %c0_24 = arith.constant 0 : index
    %c0_25 = arith.constant 0 : index
    %51 = vector.load %arg9[%c0_24, %c0_25] : memref<8x1xf32, #tpu.memory_space<vmem>>, vector<8x1xf32>
    tpu.vector_store %arg9[%c0_24, %c0_25], %31 {strides = array<i32>} : memref<8x1xf32, #tpu.memory_space<vmem>>, vector<8x1xf32>,
    %52 = arith.cmpi eq, %3, %1 : i32
    %53 = arith.extui %52 : i1 to i32
    %c0_i32_26 = arith.constant 0 : i32
    %54 = arith.cmpi ne, %53, %c0_i32_26 : i32
    scf.if %54 {
      %c0_27 = arith.constant 0 : index
      %c0_28 = arith.constant 0 : index
      %55 = vector.load %arg11[%c0_27, %c0_28] : memref<8x1xf32, #tpu.memory_space<vmem>>, vector<8x1xf32>
      %c0_29 = arith.constant 0 : index
      %c0_30 = arith.constant 0 : index
      %56 = vector.load %arg10[%c0_29, %c0_30] : memref<8x1xf32, #tpu.memory_space<vmem>>, vector<8x1xf32>
      %57 = tpu.reciprocal %56 {approx = true} : vector<8x1xf32> -> vector<8x1xf32>
      %58 = arith.mulf %55, %57 : vector<8x1xf32>
      %59 = tpu.transpose %58, [1, 0] : vector<8x1xf32> -> vector<1x8xf32>
      %c0_31 = arith.constant 0 : index
      %c0_32 = arith.constant 0 : index
      %c0_33 = arith.constant 0 : index
      %60 = vector.load %arg7[%c0_31, %c0_32, %c0_33] : memref<1x1x8xf32, #tpu.memory_space<vmem>>, vector<1x1x8xf32>
      %61 = vector.shape_cast %60 : vector<1x1x8xf32> to vector<1x8xf32>
      %62 = vector.shape_cast %59 : vector<1x8xf32> to vector<1x1x8xf32>
      tpu.vector_store %arg7[%c0_31, %c0_32, %c0_33], %62 {strides = array<i32>} : memref<1x1x8xf32, #tpu.memory_space<vmem>>, vector<1x1x8xf32>,
    } else {
    }
    return
  }
  func.func @transform_0(%arg0: i32, %arg1: i32, %arg2: memref<1xi32, #tpu.memory_space<smem>>, %arg3: memref<1xi32, #tpu.memory_space<smem>>) -> (i32, i32, i32) {
    %0 = arith.index_cast %arg1 : i32 to index
    %1 = memref.load %arg2[%0] : memref<1xi32, #tpu.memory_space<smem>>
    %c0_i32 = arith.constant 0 : i32
    %c0_i32_0 = arith.constant 0 : i32
    return %arg0, %1, %c0_i32 : i32, i32, i32
  }
  func.func @transform_1(%arg0: i32, %arg1: i32, %arg2: memref<1xi32, #tpu.memory_space<smem>>, %arg3: memref<1xi32, #tpu.memory_space<smem>>) -> (i32, i32, i32) {
    %0 = arith.index_cast %arg1 : i32 to index
    %1 = memref.load %arg3[%0] : memref<1xi32, #tpu.memory_space<smem>>
    %c0_i32 = arith.constant 0 : i32
    %c0_i32_0 = arith.constant 0 : i32
    return %arg0, %1, %c0_i32 : i32, i32, i32
  }
  func.func @transform_2(%arg0: i32, %arg1: i32, %arg2: memref<1xi32, #tpu.memory_space<smem>>, %arg3: memref<1xi32, #tpu.memory_space<smem>>) -> (i32, i32) {
    %c0_i32 = arith.constant 0 : i32
    %c0_i32_0 = arith.constant 0 : i32
    %c0_i32_1 = arith.constant 0 : i32
    return %c0_i32, %c0_i32_0 : i32, i32
  }
  func.func @transform_3(%arg0: i32, %arg1: i32, %arg2: memref<1xi32, #tpu.memory_space<smem>>, %arg3: memref<1xi32, #tpu.memory_space<smem>>) -> (i32, i32, i32) {
    %0 = arith.index_cast %arg1 : i32 to index
    %1 = memref.load %arg2[%0] : memref<1xi32, #tpu.memory_space<smem>>
    %c0_i32 = arith.constant 0 : i32
    %c0_i32_0 = arith.constant 0 : i32
    return %arg0, %c0_i32, %1 : i32, i32, i32
  }
}

</mosaic_0001>

<llo_original>
// kernel: tpu_custom_call.1
$region0: #{tpu_custom_call.1}
  #allocation0 [shape = 'u32[]', space=smem, size = 0x4, offset = 0x4, fixed_abs, tag = 'smem constant byte address 0x4 - core index']
  #allocation1 [shape = 'u32[144,128]{1,0:T(1,128)}', space=vmem, size = 0x12000, scoped, tag = 'internal scratch']
  #allocation2 [shape = 'bf16[8,32]{1,0:T(8,128)(2,1)}', space=vmem, size = 0x800, scoped, tag = 'scratch operand']
  #allocation3 [shape = 'f32[8,1]{1,0:T(8,128)}', space=vmem, size = 0x1000, scoped, tag = 'scratch operand']
  #allocation4 [shape = 'f32[8,1]{1,0:T(8,128)}', space=vmem, size = 0x1000, scoped, tag = 'scratch operand']
  #allocation5 [shape = 'f32[8,1]{1,0:T(8,128)}', space=vmem, size = 0x1000, scoped, tag = 'scratch operand']
  #allocation6 [shape = 's32[1]{0}', space=sflag, size = 0x4, scoped, tag = 'scoped memory for tpu_custom_call.1']
  #allocation7 [shape = 's32[1]{0:T(128)S(6)}', space=smem, size = 0x200, scoped, tag = 'prefetched SMEM operand 0']
  #allocation8 [shape = 's32[1]{0:T(128)S(6)}', space=smem, size = 0x200, scoped, tag = 'prefetched SMEM operand 1']
  %s0 = inlined_call_operand.<no memory space> [shape: s32[1], index: 0, kind: input, shape index: {}]
  %s1 = inlined_call_operand.<no memory space> [shape: s32[1], index: 1, kind: input, shape index: {}]
  %s2 = inlined_call_operand.vmem [shape: f32[2,8,32], index: 2, kind: input, shape index: {}]
  %s3 = inlined_call_operand.vmem [shape: f32[2,8,32], index: 3, kind: input, shape index: {}]
  %s4 = inlined_call_operand.vmem [shape: bf16[65,32], index: 4, kind: input, shape index: {}]
  %s5 = inlined_call_operand.hbm [shape: f32[2,1,8], index: 5, kind: output, shape index: {}]
  %s6 = sld [smem:[#allocation0]]
  $region53: #{tpu_custom_call.1} parent=0
    _
  %s8 = ssub.s32 1, %s6
  %s9 = scalar_select 0, %s8, %s6
  %10 = sst [smem:[#allocation7]] %s0
  %11 = sst [smem:[#allocation8]] %s1
  $region1: #{tpu_custom_call.1} parent=0
    #allocation9 [shape = 'u8[1024]{0}', space=vmem, size = 0x400, scoped, tag = 'output window, operand 0']
    #allocation10 [shape = 's32[2]{0}', space=sflag, size = 0x8, scoped, tag = 'scoped memory for tpu_custom_call.1']
    %12 = vsyncpa [#allocation10], 0
    %s13 = scalar_lea.sflag [#allocation10], 1
    %14 = vsyncpa %s13, 0
    loop: start=0, step=1, limit=4
    $region2: #{tpu_custom_call.1} parent=1 // loop_pre_header
      _
    $region3: #{tpu_custom_call.1} parent=1 // loop_header
      %s16 = sphi 0, %s20
      %p17 = scmp.ge.s32.totalorder %s16, 4
      %s23 = sphi 0, %s35
      %s24 = sphi 0, %s31
      %s25 = sphi 0, %s23
      %s26 = sphi 0, %s24
      %s27 = sphi 0, %s25
      %s28 = sphi 0, %s26
      %s42 = sphi 0, %s44
      %s45 = sphi 0, %s42
      %s46 = sphi 0, %s45
      %s62 = sphi 0, %s46
      %s72 = sphi 0, %s74
      %s75 = sphi 0, %s72
      %s76 = sphi 0, %s75
      %s92 = sphi 0, %s76
      %s96 = sphi 0, %s96
      %s98 = sphi 0, %s96
      %s99 = sphi 0, %s98
      %s113 = sphi 0, %s99
      %s123 = sphi 0, %s125
      %s126 = sphi 0, %s123
      %s127 = sphi 0, %s126
      %s143 = sphi 0, %s127
    $region4: #{tpu_custom_call.1} parent=1 // loop_header_branch
      %19 = sbr.rel (%p17) target = $region8
    $region5: #{tpu_custom_call.1} parent=1 // loop_body
      %s21 = ssub.s32 %s16, 1
      %s22 = ssub.s32 %s16, 2
      %s29 = sadd.s32 1, %s24
      %p30 = scmp.ge.s32.totalorder %s29, 1
      %s31 = scalar_select %p30, 0, %s29
      %s32 = sadd.s32 1, %s23
      %s33 = scalar_select %p30, %s32, %s23
      %p34 = scmp.ge.s32.totalorder %s33, 2
      %s35 = scalar_select %p34, 0, %s33
      %s36 = sld [smem:[#allocation7 + %s24]]
      %s37 = sld [smem:[#allocation7 + %s31]]
      %s38 = ssub.s32 %s23, %s35
      %s39 = ssub.s32 %s36, %s37
      %s40 = sor.u32 %s38, %s39
      %p41 = scmp.eq.s32.totalorder %s40, 0
      %s43 = sadd.s32 %s42, 1
      %s44 = scalar_select %p41, %s42, %s43
      %p47 = pneg %p41
      %p48 = scmp.eq.s32.totalorder %s16, 1
      %p49 = por %p47, %p48
      %p50 = scmp.ne.s32.totalorder %s42, %s45
      %p51 = scmp.eq.s32.totalorder %s16, 0
      %p52 = por %p50, %p51
      %p53 = scmp.ne.s32.totalorder %s42, %s45
      %p54 = scmp.eq.s32.totalorder %s21, 1
      %p55 = por %p53, %p54
      %p56 = scmp.ne.s32.totalorder %s45, %s46
      %p57 = scmp.eq.s32.totalorder %s21, 0
      %p58 = por %p56, %p57
      %p59 = scmp.ne.s32.totalorder %s45, %s46
      %p60 = scmp.eq.s32.totalorder %s22, 1
      %p61 = por %p59, %p60
      %p63 = scmp.ne.s32.totalorder %s46, %s62
      %p64 = scmp.eq.s32.totalorder %s22, 0
      %p65 = por %p63, %p64
      %s66 = sld [smem:[#allocation8 + %s24]]
      %s67 = sld [smem:[#allocation8 + %s31]]
      %s68 = ssub.s32 %s23, %s35
      %s69 = ssub.s32 %s66, %s67
      %s70 = sor.u32 %s68, %s69
      %p71 = scmp.eq.s32.totalorder %s70, 0
      %s73 = sadd.s32 %s72, 1
      %s74 = scalar_select %p71, %s72, %s73
      %p77 = pneg %p71
      %p78 = scmp.eq.s32.totalorder %s16, 1
      %p79 = por %p77, %p78
      %p80 = scmp.ne.s32.totalorder %s72, %s75
      %p81 = scmp.eq.s32.totalorder %s16, 0
      %p82 = por %p80, %p81
      %p83 = scmp.ne.s32.totalorder %s72, %s75
      %p84 = scmp.eq.s32.totalorder %s21, 1
      %p85 = por %p83, %p84
      %p86 = scmp.ne.s32.totalorder %s75, %s76
      %p87 = scmp.eq.s32.totalorder %s21, 0
      %p88 = por %p86, %p87
      %p89 = scmp.ne.s32.totalorder %s75, %s76
      %p90 = scmp.eq.s32.totalorder %s22, 1
      %p91 = por %p89, %p90
      %p93 = scmp.ne.s32.totalorder %s76, %s92
      %p94 = scmp.eq.s32.totalorder %s22, 0
      %p95 = por %p93, %p94
      %s97 = sadd.s32 %s96, 1
      %p100 = scmp.eq.s32.totalorder %s16, 1
      %p101 = scmp.ne.s32.totalorder %s96, %s98
      %p102 = scmp.eq.s32.totalorder %s16, 0
      %p103 = por %p101, %p102
      %p104 = scmp.ne.s32.totalorder %s96, %s98
      %p105 = scmp.eq.s32.totalorder %s21, 1
      %p106 = por %p104, %p105
      %p107 = scmp.ne.s32.totalorder %s98, %s99
      %p108 = scmp.eq.s32.totalorder %s21, 0
      %p109 = por %p107, %p108
      %p110 = scmp.ne.s32.totalorder %s98, %s99
      %p111 = scmp.eq.s32.totalorder %s22, 1
      %p112 = por %p110, %p111
      %p114 = scmp.ne.s32.totalorder %s99, %s113
      %p115 = scmp.eq.s32.totalorder %s22, 0
      %p116 = por %p114, %p115
      %s117 = sld [smem:[#allocation7 + %s24]]
      %s118 = sld [smem:[#allocation7 + %s31]]
      %s119 = ssub.s32 %s23, %s35
      %s120 = ssub.s32 %s117, %s118
      %s121 = sor.u32 %s119, %s120
      %p122 = scmp.eq.s32.totalorder %s121, 0
      %s124 = sadd.s32 %s123, 1
      %s125 = scalar_select %p122, %s123, %s124
      %p128 = pneg %p122
      %p129 = scmp.eq.s32.totalorder %s16, 1
      %p130 = por %p128, %p129
      %p131 = scmp.ne.s32.totalorder %s123, %s126
      %p132 = scmp.eq.s32.totalorder %s16, 0
      %p133 = por %p131, %p132
      %p134 = scmp.ne.s32.totalorder %s123, %s126
      %p135 = scmp.eq.s32.totalorder %s21, 1
      %p136 = por %p134, %p135
      %p137 = scmp.ne.s32.totalorder %s126, %s127
      %p138 = scmp.eq.s32.totalorder %s21, 0
      %p139 = por %p137, %p138
      %p140 = scmp.ne.s32.totalorder %s126, %s127
      %p141 = scmp.eq.s32.totalorder %s22, 1
      %p142 = por %p140, %p141
      %p144 = scmp.ne.s32.totalorder %s127, %s143
      %p145 = scmp.eq.s32.totalorder %s22, 0
      %p146 = por %p144, %p145
      %p147 = scmp.le.s32.totalorder 1, %s16
      %p148 = scmp.lt.s32.totalorder %s16, 3
      %p149 = pnand %p147, %p148
      %p150 = pneg %p149
      // Predicated region
      $region9: #{tpu_custom_call.1} parent=5 // pred_check
        _
      $region10: #{tpu_custom_call.1} parent=5 // pred_check_branch
        %152 = sbr.rel (%p149) target = $region12
      $region11: #{tpu_custom_call.1} parent=5 // pred_region
        %s153 = ssub.s32 %s16, 1
        // Predicated region
        $region13: #{tpu_custom_call.1} parent=11 // pred_check
          %p154 = pneg %p109
        $region14: #{tpu_custom_call.1} parent=11 // pred_check_branch
          %156 = sbr.rel (%p154) target = $region16
        $region15: #{tpu_custom_call.1} parent=11 // pred_region
          _
        $region16: #{tpu_custom_call.1} parent=11 // pred_fallthru
          _
      $region12: #{tpu_custom_call.1} parent=5 // pred_fallthru
        _
      %p157 = scmp.lt.s32.totalorder %s16, 2
      // Predicated region
      $region17: #{tpu_custom_call.1} parent=5 // pred_check
        %p158 = pneg %p157
      $region18: #{tpu_custom_call.1} parent=5 // pred_check_branch
        %160 = sbr.rel (%p158) target = $region20
      $region19: #{tpu_custom_call.1} parent=5 // pred_region
        // Predicated region
        $region21: #{tpu_custom_call.1} parent=19 // pred_check
          %p161 = pneg %p52
        $region22: #{tpu_custom_call.1} parent=19 // pred_check_branch
          %163 = sbr.rel (%p161) target = $region24
        $region23: #{tpu_custom_call.1} parent=19 // pred_region
          %s164 = sld [smem:[#allocation7 + %s24]]
          %p165 = scmp.lt.s32.totalorder %s23, 1
          %s166 = scalar_select %p165, %s23, 1
          %p167 = scmp.lt.s32.totalorder %s164, 0
          %s168 = scalar_select %p167, %s164, 0
          %s169 = sadd.s32 %s168, %s166
          %s170 = smul.addr %s169, 8
          %s171 = scalar_lea.vmem %s2, %s170
          %s172 = sld [smem:[#allocation7 + %s24]]
        $region24: #{tpu_custom_call.1} parent=19 // pred_fallthru
          _
        // Predicated region
        $region25: #{tpu_custom_call.1} parent=19 // pred_check
          %p173 = pneg %p82
        $region26: #{tpu_custom_call.1} parent=19 // pred_check_branch
          %175 = sbr.rel (%p173) target = $region28
        $region27: #{tpu_custom_call.1} parent=19 // pred_region
          %s176 = sld [smem:[#allocation8 + %s24]]
          %p177 = scmp.lt.s32.totalorder %s23, 1
          %s178 = scalar_select %p177, %s23, 1
          %p179 = scmp.lt.s32.totalorder %s176, 0
          %s180 = scalar_select %p179, %s176, 0
          %s181 = sadd.s32 %s180, %s178
          %s182 = smul.addr %s181, 8
          %s183 = scalar_lea.vmem %s3, %s182
          %s184 = sld [smem:[#allocation8 + %s24]]
        $region28: #{tpu_custom_call.1} parent=19 // pred_fallthru
          _
      $region20: #{tpu_custom_call.1} parent=5 // pred_fallthru
        _
      %p185 = scmp.le.s32.totalorder 1, %s16
      %p186 = scmp.lt.s32.totalorder %s16, 3
      %p187 = pnand %p185, %p186
      %p188 = pneg %p187
      // Predicated region
      $region29: #{tpu_custom_call.1} parent=5 // pred_check
        _
      $region30: #{tpu_custom_call.1} parent=5 // pred_check_branch
        %190 = sbr.rel (%p187) target = $region32
      $region31: #{tpu_custom_call.1} parent=5 // pred_region
        %s191 = ssub.s32 %s16, 1
        %s192 = sld [smem:[#allocation7 + %s26]]
        %p193 = scmp.lt.s32.totalorder %s25, 1
        %s194 = scalar_select %p193, %s25, 1
        %p195 = scmp.lt.s32.totalorder %s192, 0
        %s196 = scalar_select %p195, %s192, 0
        %s197 = sadd.s32 %s196, %s194
        %s198 = smul.addr %s197, 8
        %s199 = scalar_lea.vmem %s2, %s198
        %p200 = pneg %p58
        %p201 = pneg %p55
        %s202 = sld [smem:[#allocation8 + %s26]]
        %p203 = scmp.lt.s32.totalorder %s25, 1
        %s204 = scalar_select %p203, %s25, 1
        %p205 = scmp.lt.s32.totalorder %s202, 0
        %s206 = scalar_select %p205, %s202, 0
        %s207 = sadd.s32 %s206, %s204
        %s208 = smul.addr %s207, 8
        %s209 = scalar_lea.vmem %s3, %s208
        %p210 = pneg %p88
        %p211 = pneg %p85
        %p212 = pneg %p109
        %p213 = pneg %p106
        %p214 = pneg %p139
        %p215 = pneg %p136
        %s216 = sand.u32 %s126, 1
        %s217 = scalar_lea.sflag [#allocation10], %s216
        %s218 = sand.u32 %s126, 1
        %s219 = scalar_lea.vmem [#allocation9], %s218
        %s220 = sld [smem:[#allocation7 + %s26]]
        %p221 = scmp.lt.s32.totalorder %s25, 1
        %s222 = scalar_select %p221, %s25, 1
        %p223 = scmp.lt.s32.totalorder %s220, 0
        %s224 = scalar_select %p223, %s220, 0
        %s225 = sadd.s32 %s224, %s222
        %s226 = smul.addr %s225, 8
        %s227 = scalar_lea.vmem %s2, %s226
        %s228 = sld [smem:[#allocation7 + %s26]]
        %s229 = sld [smem:[#allocation8 + %s26]]
        %p230 = scmp.lt.s32.totalorder %s25, 1
        %s231 = scalar_select %p230, %s25, 1
        %p232 = scmp.lt.s32.totalorder %s229, 0
        %s233 = scalar_select %p232, %s229, 0
        %s234 = sadd.s32 %s233, %s231
        %s235 = smul.addr %s234, 8
        %s236 = scalar_lea.vmem %s3, %s235
        %s237 = sld [smem:[#allocation8 + %s26]]
        %s238 = sld [smem:[#allocation7 + %s26]]
        %s240 = sld [smem:[#allocation7 + %s26]]
        %s241 = sld [smem:[#allocation8 + %s26]]
        %p242 = scmp.eq.s32.totalorder %s241, 0
        // Predicated region
        $region33: #{tpu_custom_call.1} parent=31 // pred_check
          %p243 = pneg %p242
        $region34: #{tpu_custom_call.1} parent=31 // pred_check_branch
          %245 = sbr.rel (%p243) target = $region36
        $region35: #{tpu_custom_call.1} parent=31 // pred_region
          %v246 = vld [vmem:[%s227] sm:$0xff]
          %v247 = vpack.c.bf16 %v246, %v246
          %v248 = vld [vmem:[%s4] sm:$0xf]
          %v249 = vld [vmem:[%s4 + $0x4] sm:$0xf]
          %v250 = vld [vmem:[%s4 + $0x8] sm:$0xf]
          %v251 = vld [vmem:[%s4 + $0xc] sm:$0xf]
          %v256 = vunpack.c.l.b16 %v248
          %v257 = vunpack.c.l.b16 %v249
          %v258 = vunpack.c.l.b16 %v250
          %v259 = vunpack.c.l.b16 %v251
          %v260 = vpack.c.b16 %v257, %v256
          %v261 = vpack.c.b16 %v259, %v258
          %vm262 = vcmask 261120
          %v264 = vsel %vm262, %v247, 0
          %v267 = vsel %vm262, %v260, 0
          %v270 = vsel %vm262, %v261, 0
          %272 = vmatprep.subr.bf16.mxu0 0
          %273 = vmatpush1.bf16.xpose.msra.mxu0 %v267
          %274 = vmatprep.subr.bf16.mxu0 0
          %275 = vmatpush1.bf16.xpose.msra.mxu0 %v270
          %276 = vmatprep.subr.bf16.mxu0 0
          %277 = vmatpush1.bf16.xpose.msra.mxu0 0
          %278 = vmatprep.subr.bf16.mxu0 0
          %279 = vmatpush1.bf16.xpose.msra.mxu0 0
          %280 = vmatprep.subr.bf16.mxu0 0
          %281 = vmatpush1.bf16.xpose.msra.mxu0 0
          %282 = vmatprep.subr.bf16.mxu0 0
          %283 = vmatpush1.bf16.xpose.msra.mxu0 0
          %284 = vmatprep.subr.bf16.mxu0 0
          %285 = vmatpush1.bf16.xpose.msra.mxu0 0
          %286 = vmatprep.subr.bf16.mxu0 0
          %287 = vmatpush1.bf16.xpose.msra.mxu0 0
          %288 = vmatprep.subr.bf16.mxu0 0
          %289 = vmatpush1.bf16.xpose.msra.mxu0 0
          %290 = vmatprep.subr.bf16.mxu0 0
          %291 = vmatpush1.bf16.xpose.msra.mxu0 0
          %292 = vmatprep.subr.bf16.mxu0 0
          %293 = vmatpush1.bf16.xpose.msra.mxu0 0
          %294 = vmatprep.subr.bf16.mxu0 0
          %295 = vmatpush1.bf16.xpose.msra.mxu0 0
          %296 = vmatprep.subr.bf16.mxu0 0
          %297 = vmatpush1.bf16.xpose.msra.mxu0 0
          %298 = vmatprep.subr.bf16.mxu0 0
          %299 = vmatpush1.bf16.xpose.msra.mxu0 0
          %300 = vmatprep.subr.bf16.mxu0 0
          %301 = vmatpush1.bf16.xpose.msra.mxu0 0
          %302 = vmatprep.subr.bf16.mxu0 0
          %303 = vmatpush1.bf16.xpose.msra.mxu0 0
          %304 = vmatprep.mubr.bf16.mxu0 0
          %305 = vmatmul.mubr.bf16.gmra.mrb[0].mxu0 %v264
          %v306 = vpop.f32.mrb[0].mxu0
          %v307 = vadd.f32 0.0, %v306
          %v308 = vpop.f32.mrb[0].mxu0
          %v309 = vpop.f32.mrb[0].mxu0
          %v310 = vpop.f32.mrb[0].mxu0
          %311 = vdwg.mxu0
          %v312 = vmul.f32 %v307, 0.17677669
          %v313 = vpack.c.bf16 %v312, %v312
          %vm314 = vcmask 257024
          %315 = vst.msk [vmem:[#allocation2] sm:$0xf] %vm314, %v313
          %vm316 = vcmask 7168
          %317 = vst.msk [vmem:[#allocation3] sm:$0xff] %vm316, -1e+30
          %318 = vst.msk [vmem:[#allocation4] sm:$0xff] %vm316, 0.0
          %319 = vst.msk [vmem:[#allocation5] sm:$0xff] %vm316, 0.0
        $region36: #{tpu_custom_call.1} parent=31 // pred_fallthru
          _
        %v320 = vld [vmem:[%s236] sm:$0xff]
        %v321 = vpack.c.bf16 %v320, %v320
        %v322 = vld [vmem:[%s4 + $0x10] sm:$0xf]
        %v323 = vld [vmem:[%s4 + $0x14] sm:$0xf]
        %v324 = vld [vmem:[%s4 + $0x18] sm:$0xf]
        %v325 = vld [vmem:[%s4 + $0x1c] sm:$0xf]
        %v326 = vld [vmem:[%s4 + $0x20] sm:$0x1]
        %v331 = vunpack.c.l.b16 %v322
        %v332 = vunpack.c.l.b16 %v323
        %v333 = vunpack.c.l.b16 %v324
        %v334 = vunpack.c.l.b16 %v325
        %v335 = vpack.c.b16 %v332, %v331
        %v336 = vpack.c.b16 %v334, %v333
        %vm337 = vcmask 261120
        %v339 = vsel %vm337, %v321, 0
        %v342 = vsel %vm337, %v335, 0
        %v345 = vsel %vm337, %v336, 0
        %347 = vmatprep.subr.bf16.mxu0 0
        %348 = vmatpush1.bf16.xpose.msra.mxu0 %v342
        %349 = vmatprep.subr.bf16.mxu0 0
        %350 = vmatpush1.bf16.xpose.msra.mxu0 %v345
        %351 = vmatprep.subr.bf16.mxu0 0
        %352 = vmatpush1.bf16.xpose.msra.mxu0 0
        %353 = vmatprep.subr.bf16.mxu0 0
        %354 = vmatpush1.bf16.xpose.msra.mxu0 0
        %355 = vmatprep.subr.bf16.mxu0 0
        %356 = vmatpush1.bf16.xpose.msra.mxu0 0
        %357 = vmatprep.subr.bf16.mxu0 0
        %358 = vmatpush1.bf16.xpose.msra.mxu0 0
        %359 = vmatprep.subr.bf16.mxu0 0
        %360 = vmatpush1.bf16.xpose.msra.mxu0 0
        %361 = vmatprep.subr.bf16.mxu0 0
        %362 = vmatpush1.bf16.xpose.msra.mxu0 0
        %363 = vmatprep.subr.bf16.mxu0 0
        %364 = vmatpush1.bf16.xpose.msra.mxu0 0
        %365 = vmatprep.subr.bf16.mxu0 0
        %366 = vmatpush1.bf16.xpose.msra.mxu0 0
        %367 = vmatprep.subr.bf16.mxu0 0
        %368 = vmatpush1.bf16.xpose.msra.mxu0 0
        %369 = vmatprep.subr.bf16.mxu0 0
        %370 = vmatpush1.bf16.xpose.msra.mxu0 0
        %371 = vmatprep.subr.bf16.mxu0 0
        %372 = vmatpush1.bf16.xpose.msra.mxu0 0
        %373 = vmatprep.subr.bf16.mxu0 0
        %374 = vmatpush1.bf16.xpose.msra.mxu0 0
        %375 = vmatprep.subr.bf16.mxu0 0
        %376 = vmatpush1.bf16.xpose.msra.mxu0 0
        %377 = vmatprep.subr.bf16.mxu0 0
        %378 = vmatpush1.bf16.xpose.msra.mxu0 0
        %379 = vmatprep.mubr.bf16.mxu0 0
        %380 = vmatmul.mubr.bf16.gmra.mrb[0].mxu0 %v339
        %v381 = vpop.f32.mrb[0].mxu0
        %v382 = vadd.f32 0.0, %v381
        %v383 = vpop.f32.mrb[0].mxu0
        %v384 = vpop.f32.mrb[0].mxu0
        %v385 = vpop.f32.mrb[0].mxu0
        %386 = vdwg.mxu0
        %v387 = vpack.c.bf16 %v382, %v382
        %v389 = vsel %vm337, %v326, 0
        %391 = vmatprep.subr.bf16.mxu0 0
        %392 = vmatpush1.bf16.xpose.msra.mxu0 %v339
        %393 = vmatprep.subr.bf16.mxu0 0
        %394 = vmatpush1.bf16.xpose.msra.mxu0 0
        %395 = vmatprep.subr.bf16.mxu0 0
        %396 = vmatpush1.bf16.xpose.msra.mxu0 0
        %397 = vmatprep.subr.bf16.mxu0 0
        %398 = vmatpush1.bf16.xpose.msra.mxu0 0
        %399 = vmatprep.subr.bf16.mxu0 0
        %400 = vmatpush1.bf16.xpose.msra.mxu0 0
        %401 = vmatprep.subr.bf16.mxu0 0
        %402 = vmatpush1.bf16.xpose.msra.mxu0 0
        %403 = vmatprep.subr.bf16.mxu0 0
        %404 = vmatpush1.bf16.xpose.msra.mxu0 0
        %405 = vmatprep.subr.bf16.mxu0 0
        %406 = vmatpush1.bf16.xpose.msra.mxu0 0
        %407 = vmatprep.subr.bf16.mxu0 0
        %408 = vmatpush1.bf16.xpose.msra.mxu0 0
        %409 = vmatprep.subr.bf16.mxu0 0
        %410 = vmatpush1.bf16.xpose.msra.mxu0 0
        %411 = vmatprep.subr.bf16.mxu0 0
        %412 = vmatpush1.bf16.xpose.msra.mxu0 0
        %413 = vmatprep.subr.bf16.mxu0 0
        %414 = vmatpush1.bf16.xpose.msra.mxu0 0
        %415 = vmatprep.subr.bf16.mxu0 0
        %416 = vmatpush1.bf16.xpose.msra.mxu0 0
        %417 = vmatprep.subr.bf16.mxu0 0
        %418 = vmatpush1.bf16.xpose.msra.mxu0 0
        %419 = vmatprep.subr.bf16.mxu0 0
        %420 = vmatpush1.bf16.xpose.msra.mxu0 0
        %421 = vmatprep.subr.bf16.mxu0 0
        %422 = vmatpush1.bf16.xpose.msra.mxu0 0
        %423 = vmatprep.mubr.bf16.mxu0 0
        %424 = vmatmul.mubr.bf16.gmra.mrb[0].mxu0 %v389
        %v425 = vpop.f32.mrb[0].mxu0
        %v426 = vadd.f32 0.0, %v425
        %v427 = vpop.f32.mrb[0].mxu0
        %v428 = vpop.f32.mrb[0].mxu0
        %v429 = vpop.f32.mrb[0].mxu0
        %430 = vdwg.mxu0
        %v431 = vld [vmem:[#allocation2] sm:$0xf]
        %v433 = vsel %vm337, %v431, 0
        %v436 = vsel %vm337, %v387, 0
        %438 = vmatprep.subr.bf16.mxu0 0
        %439 = vmatpush1.bf16.xpose.msra.mxu0 %v436
        %440 = vmatprep.subr.bf16.mxu0 0
        %441 = vmatpush1.bf16.xpose.msra.mxu0 0
        %442 = vmatprep.subr.bf16.mxu0 0
        %443 = vmatpush1.bf16.xpose.msra.mxu0 0
        %444 = vmatprep.subr.bf16.mxu0 0
        %445 = vmatpush1.bf16.xpose.msra.mxu0 0
        %446 = vmatprep.subr.bf16.mxu0 0
        %447 = vmatpush1.bf16.xpose.msra.mxu0 0
        %448 = vmatprep.subr.bf16.mxu0 0
        %449 = vmatpush1.bf16.xpose.msra.mxu0 0
        %450 = vmatprep.subr.bf16.mxu0 0
        %451 = vmatpush1.bf16.xpose.msra.mxu0 0
        %452 = vmatprep.subr.bf16.mxu0 0
        %453 = vmatpush1.bf16.xpose.msra.mxu0 0
        %454 = vmatprep.subr.bf16.mxu0 0
        %455 = vmatpush1.bf16.xpose.msra.mxu0 0
        %456 = vmatprep.subr.bf16.mxu0 0
        %457 = vmatpush1.bf16.xpose.msra.mxu0 0
        %458 = vmatprep.subr.bf16.mxu0 0
        %459 = vmatpush1.bf16.xpose.msra.mxu0 0
        %460 = vmatprep.subr.bf16.mxu0 0
        %461 = vmatpush1.bf16.xpose.msra.mxu0 0
        %462 = vmatprep.subr.bf16.mxu0 0
        %463 = vmatpush1.bf16.xpose.msra.mxu0 0
        %464 = vmatprep.subr.bf16.mxu0 0
        %465 = vmatpush1.bf16.xpose.msra.mxu0 0
        %466 = vmatprep.subr.bf16.mxu0 0
        %467 = vmatpush1.bf16.xpose.msra.mxu0 0
        %468 = vmatprep.subr.bf16.mxu0 0
        %469 = vmatpush1.bf16.xpose.msra.mxu0 0
        %470 = vmatprep.mubr.bf16.mxu0 0
        %471 = vmatmul.mubr.bf16.gmra.mrb[0].mxu0 %v433
        %v472 = vpop.f32.mrb[0].mxu0
        %v473 = vadd.f32 0.0, %v472
        %v474 = vpop.f32.mrb[0].mxu0
        %v475 = vpop.f32.mrb[0].mxu0
        %v476 = vpop.f32.mrb[0].mxu0
        %477 = vdwg.mxu0
        %v478 = vlaneseq
        %v479 = vshrl.u32 %v478, 7
        %s480 = smul.u32 %s240, 8
        %v481 = vstv %s480
        %v482 = vadd.s32 %v479, %v481
        %v483 = vlaneseq
        %v484 = vand.u32 %v483, 127
        %s485 = smul.u32 %s241, 8
        %v486 = vstv %s485
        %v487 = vadd.s32 %v484, %v486
        %vm488 = vcmp.le.s32.totalorder %v487, %v482
        %v489 = vsel %vm488, %v473, -1e+30
        %v490 = vld [vmem:[#allocation3] sm:$0xff]
        %vm491 = vcmask 64512
        %v492 = vsel %vm491, %v489, -inf
        %493 = vmax.xlane.f32.xlu0 %v492
        %v494 = vpop.xlane.xlu0 %493
        %v495 = vmax.f32 %v490, %v494
        %v496 = vsub.f32 %v490, %v495
        %v497 = vmul.f32 %v496, 1.442695
        %v498 = vpow.pop %v497
        %500 = vset.pattern.permute.xlu0 0
        %501 = vperm.xlu0 %500, %v495
        %v502 = vpop.permute.xlu0 %501
        %v504 = vsub.f32 %v489, %v502
        %v505 = vmul.f32 %v504, 1.442695
        %v506 = vpow.pop %v505
        %v507 = vld [vmem:[#allocation4] sm:$0xff]
        %v508 = vmul.f32 %v498, %v507
        %v509 = vsel %vm491, %v506, 0.0
        %510 = vadd.xlane.f32.xlu0 %v509
        %v511 = vpop.xlane.xlu0 %510
        %v512 = vadd.f32 %v508, %v511
        %vm513 = vcmask 7168
        %514 = vst.msk [vmem:[#allocation4] sm:$0xff] %vm513, %v512
        %v515 = vld [vmem:[#allocation5] sm:$0xff]
        %v516 = vmul.f32 %v498, %v515
        %v517 = vlaneseq
        %v518 = vshrl.u32 %v517, 7
        %v519 = vsub.s32 0, %v518
        %v520 = vrot.slane %v426, %v519
        %v521 = vmul.f32 %v506, %v520
        %v522 = vsel %vm491, %v521, 0.0
        %523 = vadd.xlane.f32.xlu0 %v522
        %v524 = vpop.xlane.xlu0 %523
        %v525 = vadd.f32 %v516, %v524
        %526 = vst.msk [vmem:[#allocation5] sm:$0xff] %vm513, %v525
        %527 = vst.msk [vmem:[#allocation3] sm:$0xff] %vm513, %v495
        %p528 = scmp.eq.s32.totalorder %s241, %s240
        // Predicated region
        $region37: #{tpu_custom_call.1} parent=31 // pred_check
          %p529 = pneg %p528
        $region38: #{tpu_custom_call.1} parent=31 // pred_check_branch
          %531 = sbr.rel (%p529) target = $region40
        $region39: #{tpu_custom_call.1} parent=31 // pred_region
          %v532 = vld [vmem:[#allocation5] sm:$0xff]
          %v533 = vld [vmem:[#allocation4] sm:$0xff]
          %v534 = vrcp.pop %v533
          %v535 = vmul.f32 %v532, %v534
          %536 = vxpose.xlu0.b32.start [1/16] %v535, 128
          %537 = vxpose.xlu0.b32.cont [2/16] 0.0, 128
          %538 = vxpose.xlu0.b32.cont [3/16] 0.0, 128
          %539 = vxpose.xlu0.b32.cont [4/16] 0.0, 128
          %540 = vxpose.xlu0.b32.cont [5/16] 0.0, 128
          %541 = vxpose.xlu0.b32.cont [6/16] 0.0, 128
          %542 = vxpose.xlu0.b32.cont [7/16] 0.0, 128
          %543 = vxpose.xlu0.b32.cont [8/16] 0.0, 128
          %544 = vxpose.xlu0.b32.cont [9/16] 0.0, 128
          %545 = vxpose.xlu0.b32.cont [10/16] 0.0, 128
          %546 = vxpose.xlu0.b32.cont [11/16] 0.0, 128
          %547 = vxpose.xlu0.b32.cont [12/16] 0.0, 128
          %548 = vxpose.xlu0.b32.cont [13/16] 0.0, 128
          %549 = vxpose.xlu0.b32.cont [14/16] 0.0, 128
          %550 = vxpose.xlu0.b32.cont [15/16] 0.0, 128
          %551 = vxpose.xlu0.b32.end [16/16] 0.0, 128
          %v552 = vpop.trf.xlu0
          %v553 = vpop.trf.xlu0
          %v554 = vpop.trf.xlu0
          %v555 = vpop.trf.xlu0
          %v556 = vpop.trf.xlu0
          %v557 = vpop.trf.xlu0
          %v558 = vpop.trf.xlu0
          %v559 = vpop.trf.xlu0
          %v560 = vpop.trf.xlu0
          %v561 = vpop.trf.xlu0
          %v562 = vpop.trf.xlu0
          %v563 = vpop.trf.xlu0
          %v564 = vpop.trf.xlu0
          %v565 = vpop.trf.xlu0
          %v566 = vpop.trf.xlu0
          %v567 = vpop.trf.xlu0
          %vm568 = vcmask 57344
          %569 = vst.msk [vmem:[%s219] sm:$0x1] %vm568, %v552
        $region40: #{tpu_custom_call.1} parent=31 // pred_fallthru
          _
        %s570 = sand.u32 %s126, 1
        %s571 = scalar_lea.sflag [#allocation10], %s570
        %s572 = sand.u32 %s126, 1
        %s573 = scalar_lea.vmem [#allocation9], %s572
        // Predicated region
        $region41: #{tpu_custom_call.1} parent=31 // pred_check
          %p574 = pneg %p136
        $region42: #{tpu_custom_call.1} parent=31 // pred_check_branch
          %576 = sbr.rel (%p574) target = $region44
        $region43: #{tpu_custom_call.1} parent=31 // pred_region
          %s577 = sld [smem:[#allocation7 + %s26]]
          %s579 = ssub.s32 16, 16
          %580 = vsyncadd %s571, %s579
          %s581 = sadd.s32 %s577, %s25
          %s582 = smul.addr %s581, 16
          %s583 = scalar_lea.hbm %s5, %s582
          %s585 = sshll.u32 %s573, 4
          %s586 = int_to_ptr.vmem [resolvable:$true] %s585
          %588 = dma.vmem_to_hbm [thread:$0]  %s586, 16, %s583, %s571
        $region44: #{tpu_custom_call.1} parent=31 // pred_fallthru
          _
      $region32: #{tpu_custom_call.1} parent=5 // pred_fallthru
        _
      %p589 = scmp.le.s32.totalorder 2, %s16
      // Predicated region
      $region45: #{tpu_custom_call.1} parent=5 // pred_check
        %p590 = pneg %p589
      $region46: #{tpu_custom_call.1} parent=5 // pred_check_branch
        %592 = sbr.rel (%p590) target = $region48
      $region47: #{tpu_custom_call.1} parent=5 // pred_region
        %s593 = ssub.s32 %s16, 2
        // Predicated region
        $region49: #{tpu_custom_call.1} parent=47 // pred_check
          %p594 = pneg %p142
        $region50: #{tpu_custom_call.1} parent=47 // pred_check_branch
          %596 = sbr.rel (%p594) target = $region52
        $region51: #{tpu_custom_call.1} parent=47 // pred_region
          %s597 = sand.u32 %s127, 1
          %s598 = scalar_lea.sflag [#allocation10], %s597
          %s599 = sand.u32 %s127, 1
          %s600 = scalar_lea.vmem [#allocation9], %s599
          %601 = dma.done %s598, 16
        $region52: #{tpu_custom_call.1} parent=47 // pred_fallthru
          _
      $region48: #{tpu_custom_call.1} parent=5 // pred_fallthru
        _
    $region6: #{tpu_custom_call.1} parent=1 // loop_footer
      %s20 = sadd.s32 1, %s16
    $region7: #{tpu_custom_call.1} parent=1 // loop_footer_branch
      %15 = sbr.rel target = $region3
    $region8: #{tpu_custom_call.1} parent=1 // loop_exit
      _
    %602 = vsyncpa [#allocation10], 1
    %s603 = scalar_lea.sflag [#allocation10], 1
    %604 = vsyncpa %s603, 1

</llo_original>
